<compile_context>
chip_gen: v6e
topology: v6e:2x2x1
jax: 0.10.0
libtpu: 0.0.40
codegen_flags: <defaults>
</compile_context>

<pallas_src>
import functools

import jax
import jax.numpy as jnp
from jax import lax
from jax.experimental import pallas as pl
from jax.experimental.pallas import tpu as pltpu


def _proj_t(w_t, x):
    """(C, F) x (C, N) -> (F, N): channel projection with a lane-dense,
    pre-transposed weight (contraction over the small C axis)."""
    return lax.dot_general(w_t, x, (((0,), (0,)), ((), ())),
                           preferred_element_type=jnp.float32)


# ---------------------------------------------------------------------------
# Path 1: fused single-pass kernel (whole N per grid step; small/medium N).
# ---------------------------------------------------------------------------
def _fused_kernel(x_ref, wq_ref, wk_ref, wv_ref, wout_ref, bout_ref, mask_ref,
                  o_ref, *, batch_block):
    """x_ref/o_ref: (bb, C, N) channels-first, N in lanes.
    wq/wk/wv: (C, hidden) bf16 (transposed, lane-dense).  wout: (C, hidden)
    bf16.  bout: (C, 1) f32.  mask: (hidden, hidden) bf16 block-diagonal."""
    wq = wq_ref[...]
    wk = wk_ref[...]
    wv = wv_ref[...]
    wout = wout_ref[...]
    bout = bout_ref[...]
    mask = mask_ref[...]

    for i in range(batch_block):            # batch_block <= 2: bounded live ranges
        x = x_ref[i].astype(jnp.bfloat16)                              # (C, N)

        # k first: its softmax (EUP exp + XLU reduce) overlaps later MXU work.
        k = _proj_t(wk, x)                                             # (hidden, N) f32
        k_max = jnp.max(k, axis=1, keepdims=True)
        p = jnp.exp(k - k_max)
        inv_sum = 1.0 / jnp.sum(p, axis=1, keepdims=True)              # exact
        p = (p * inv_sum).astype(jnp.bfloat16)                         # softmax(k)

        v = _proj_t(wv, x)                                             # (hidden, N) f32

        # ctx[d, e] = sum_n softmax(k)[d, n] * v[e, n]
        ctx = lax.dot_general(p, v.astype(jnp.bfloat16),
                              (((1,), (1,)), ((), ())),
                              preferred_element_type=jnp.float32)      # (hidden, hidden)
        ctx_bf = ctx.astype(jnp.bfloat16) * mask                       # bf16 head mask

        # Reassociated output projection:
        #   m_proj[c, d] = sum_e wout[c, e] * ctx[d, e]
        #   a[c, c']     = sum_d m_proj[c, d] * wq_t[c', d]
        #   y            = a @ x + b
        m_proj = lax.dot_general(wout, ctx_bf, (((1,), (1,)), ((), ())),
                                 preferred_element_type=jnp.float32)   # (C, hidden)
        a = lax.dot_general(m_proj.astype(jnp.bfloat16), wq,
                            (((1,), (1,)), ((), ())),
                            preferred_element_type=jnp.float32)        # (C, C)
        y = jnp.dot(a.astype(jnp.bfloat16), x,
                    preferred_element_type=jnp.float32) + bout         # (C, N)
        o_ref[i] = y.astype(o_ref.dtype)


# ---------------------------------------------------------------------------
# Path 2: flash-style N-tiled two-pass pipeline (large N / v7x VMEM budget).
# ---------------------------------------------------------------------------
def _ctx_accum_kernel(x_ref, wk_ref, wv_ref, wq_ref, wout_ref, mask_ref,
                      a_ref, m_scr, s_scr, ctx_scr):
    """Pass A: online-softmax context accumulation over N tiles, then emit the
    fused (C, C) operator a = wout @ (ctx_norm * mask) @ wq^T per batch elem."""
    j = pl.program_id(1)

    @pl.when(j == 0)
    def _():
        m_scr[...] = jnp.full_like(m_scr, -jnp.inf)
        s_scr[...] = jnp.zeros_like(s_scr)
        ctx_scr[...] = jnp.zeros_like(ctx_scr)

    x = x_ref[0].astype(jnp.bfloat16)                                  # (C, tn)

    k = _proj_t(wk_ref[...], x)                                        # (hidden, tn)
    m_prev = m_scr[...]                                                # (hidden, 1)
    m_new = jnp.maximum(m_prev, jnp.max(k, axis=1, keepdims=True))
    alpha = jnp.exp(m_prev - m_new)                                    # (hidden, 1)
    p = jnp.exp(k - m_new)                                             # (hidden, tn)
    s_scr[...] = alpha * s_scr[...] + jnp.sum(p, axis=1, keepdims=True)

    v = _proj_t(wv_ref[...], x)                                        # (hidden, tn)
    ctx_scr[...] = alpha * ctx_scr[...] + lax.dot_general(
        p.astype(jnp.bfloat16), v.astype(jnp.bfloat16),
        (((1,), (1,)), ((), ())),
        preferred_element_type=jnp.float32)                            # (d, e)
    m_scr[...] = m_new

    @pl.when(j == pl.num_programs(1) - 1)
    def _():
        inv_s = 1.0 / s_scr[...]                                       # exact, (hidden, 1)
        ctx_bf = (ctx_scr[...] * inv_s).astype(jnp.bfloat16) * mask_ref[...]
        m_proj = lax.dot_general(wout_ref[...], ctx_bf,
                                 (((1,), (1,)), ((), ())),
                                 preferred_element_type=jnp.float32)   # (C, hidden)
        a_ref[0] = lax.dot_general(m_proj.astype(jnp.bfloat16), wq_ref[...],
                                   (((1,), (1,)), ((), ())),
                                   preferred_element_type=jnp.float32)  # (C, C)


def _output_kernel(x_ref, a_ref, bout_ref, o_ref):
    """Pass B: y_tile = a @ x_tile + b (pure streaming, lane-dense stores)."""
    x = x_ref[0].astype(jnp.bfloat16)                                  # (C, tn)
    y = jnp.dot(a_ref[0].astype(jnp.bfloat16), x,
                preferred_element_type=jnp.float32) + bout_ref[...]
    o_ref[0] = y.astype(o_ref.dtype)


# ---------------------------------------------------------------------------
# Wrapper
# ---------------------------------------------------------------------------
def _pick_tile_n(n, cap):
    """Largest multiple-of-128 divisor of n that is <= cap, else n (no tiling)."""
    best = None
    d = 128
    while d <= min(n, cap):
        if n % d == 0:
            best = d
        d += 128
    return best if best is not None else n


def linear_attention(x_nchw, w_qkv, w_out, b_out, *, heads, dim_head,
                     force_tiled=False, max_tile_n=512, fused_n_limit=4096):
    b, c, h, w = x_nchw.shape
    n = h * w
    hidden = heads * dim_head
    assert w_qkv.shape == (3 * hidden, c)
    assert w_out.shape == (c, hidden)
    assert b_out.shape == (c,)

    # NCHW -> (B, C, N): pure reshape, N sits in the 128-lane axis.
    x_cn = x_nchw.reshape(b, c, n)

    # Split + transpose projection weights once in the wrapper -> lane-dense
    # (C, hidden) bf16 operands (to_qkv channel order is [q; k; v]).
    wq_t = jnp.transpose(w_qkv[0 * hidden:1 * hidden]).astype(jnp.bfloat16)
    wk_t = jnp.transpose(w_qkv[1 * hidden:2 * hidden]).astype(jnp.bfloat16)
    wv_t = jnp.transpose(w_qkv[2 * hidden:3 * hidden]).astype(jnp.bfloat16)
    wout_b = w_out.astype(jnp.bfloat16)
    bias = b_out.reshape(c, 1).astype(jnp.float32)

    # Per-head block-diagonal mask (bf16: exact 0/1), hoisted out of the kernel.
    head_id = jnp.arange(hidden, dtype=jnp.int32) // dim_head
    mask = (head_id[:, None] == head_id[None, :]).astype(jnp.bfloat16)

    w_spec = pl.BlockSpec((c, hidden), lambda *idx: (0, 0))
    bias_spec = pl.BlockSpec((c, 1), lambda *idx: (0, 0))
    mask_spec = pl.BlockSpec((hidden, hidden), lambda *idx: (0, 0))

    use_tiled = force_tiled or n > fused_n_limit

    if not use_tiled:
        # Fused single-pass path.  bb <= 2 bounds live ranges; bb chosen so the
        # grid has >= 2 steps whenever B >= 2 (megacore + pipelining).
        bb = 2 if (b >= 4 and b % 2 == 0) else 1
        kernel = functools.partial(_fused_kernel, batch_block=bb)
        out_cn = pl.pallas_call(
            kernel,
            out_shape=jax.ShapeDtypeStruct((b, c, n), x_nchw.dtype),
            grid_spec=pltpu.PrefetchScalarGridSpec(
                num_scalar_prefetch=0,
                grid=(b // bb,),
                in_specs=[
                    pl.BlockSpec((bb, c, n), lambda i: (i, 0, 0)),
                    w_spec, w_spec, w_spec, w_spec, bias_spec, mask_spec,
                ],
                out_specs=pl.BlockSpec((bb, c, n), lambda i: (i, 0, 0)),
            ),
            compiler_params=pltpu.CompilerParams(
                dimension_semantics=("parallel",)),
        )(x_cn, wq_t, wk_t, wv_t, wout_b, bias, mask)
        return out_cn.reshape(b, c, h, w)

    # Flash-style N-tiled two-pass path (bb = 1 per grid step).
    tn = _pick_tile_n(n, max_tile_n)
    n_tiles = n // tn

    # Pass A: per-batch fused (C, C) operator from the online-softmax context.
    a_op = pl.pallas_call(
        _ctx_accum_kernel,
        out_shape=jax.ShapeDtypeStruct((b, c, c), jnp.float32),
        grid_spec=pltpu.PrefetchScalarGridSpec(
            num_scalar_prefetch=0,
            grid=(b, n_tiles),
            in_specs=[
                pl.BlockSpec((1, c, tn), lambda bi, j: (bi, 0, j)),
                w_spec, w_spec, w_spec, w_spec, mask_spec,
            ],
            out_specs=pl.BlockSpec((1, c, c), lambda bi, j: (bi, 0, 0)),
            scratch_shapes=[
                pltpu.VMEM((hidden, 1), jnp.float32),       # running max
                pltpu.VMEM((hidden, 1), jnp.float32),       # running sum
                pltpu.VMEM((hidden, hidden), jnp.float32),  # ctx accumulator
            ],
        ),
        compiler_params=pltpu.CompilerParams(
            dimension_semantics=("parallel", "arbitrary")),
    )(x_cn, wk_t, wv_t, wq_t, wout_b, mask)

    # Pass B: stream x tiles, y = a @ x + b.
    out_cn = pl.pallas_call(
        _output_kernel,
        out_shape=jax.ShapeDtypeStruct((b, c, n), x_nchw.dtype),
        grid_spec=pltpu.PrefetchScalarGridSpec(
            num_scalar_prefetch=0,
            grid=(b, n_tiles),
            in_specs=[
                pl.BlockSpec((1, c, tn), lambda bi, j: (bi, 0, j)),
                pl.BlockSpec((1, c, c), lambda bi, j: (bi, 0, 0)),
                bias_spec,
            ],
            out_specs=pl.BlockSpec((1, c, tn), lambda bi, j: (bi, 0, j)),
        ),
        compiler_params=pltpu.CompilerParams(
            dimension_semantics=("parallel", "parallel")),
    )(x_cn, a_op, bias)
    return out_cn.reshape(b, c, h, w)


def linear_attention_ref(x, w_qkv, w_out, b_out, *, heads, dim_head):
    """Plain-JAX (f32) reference mirroring the PyTorch forward exactly."""
    b, c, h, w = x.shape
    n = h * w
    hidden = heads * dim_head
    x_flat = x.reshape(b, c, n)
    qkv = jnp.einsum('oc,bcn->bon', w_qkv, x_flat)           # (B, 3*hidden, N)
    qkv = qkv.reshape(b, 3, heads, dim_head, n)
    q, k, v = qkv[:, 0], qkv[:, 1], qkv[:, 2]                # (B, H, D, N)
    k = jax.nn.softmax(k, axis=-1)
    context = jnp.einsum('bhdn,bhen->bhde', k, v)
    out = jnp.einsum('bhde,bhdn->bhen', context, q)          # (B, H, D, N)
    out = out.reshape(b, hidden, n)
    y = jnp.einsum('oc,bcn->bon', w_out, out) + b_out[None, :, None]
    return y.reshape(b, c, h, w)


if __name__ == "__main__":
    # Module config: dim=4, heads=4, dim_head=32 -> hidden_dim=128
    dim, heads, dim_head = 4, 4, 32
    hidden = heads * dim_head
    B, H, W = 2, 16, 16

    key = jax.random.PRNGKey(0)
    kx, kq, ko, kb = jax.random.split(key, 4)

    x = jax.random.normal(kx, (B, dim, H, W), dtype=jnp.float32)
    # Deterministic synthetic parameters (Conv2d 1x1 weights, squeezed).
    w_qkv = jax.random.normal(kq, (3 * hidden, dim), dtype=jnp.float32) * 0.1
    w_out = jax.random.normal(ko, (dim, hidden), dtype=jnp.float32) * 0.1
    b_out = jax.random.normal(kb, (dim,), dtype=jnp.float32) * 0.1

    y_ref = linear_attention_ref(x, w_qkv, w_out, b_out,
                                 heads=heads, dim_head=dim_head)

    # Default fused single-pass path (what these shapes take).
    y = jax.block_until_ready(
        linear_attention(x, w_qkv, w_out, b_out, heads=heads, dim_head=dim_head))
    assert y.shape == (B, dim, H, W)
    # Tolerance accounts for bf16 MXU inputs (f32 accumulation).
    assert jnp.allclose(y, y_ref, atol=2e-2, rtol=2e-2), \
        f"fused path: max abs err {jnp.max(jnp.abs(y - y_ref))}"

    # Flash-style N-tiled two-pass path (taken automatically for large N),
    # forced here with tile_n=128 (2 N-tiles) so it is exercised and verified.
    y_t = jax.block_until_ready(
        linear_attention(x, w_qkv, w_out, b_out, heads=heads, dim_head=dim_head,
                         force_tiled=True, max_tile_n=128))
    assert jnp.allclose(y_t, y_ref, atol=2e-2, rtol=2e-2), \
        f"tiled path: max abs err {jnp.max(jnp.abs(y_t - y_ref))}"

    print("KERNEL_OK")
</pallas_src>

<mosaic_0001>
module attributes {stable_mosaic.version = 11 : i64} {
  func.func @_fused_kernel(%arg0: i32, %arg1: memref<1x4x256xf32, #tpu.memory_space<vmem>>, %arg2: memref<4x128xbf16, #tpu.memory_space<vmem>>, %arg3: memref<4x128xbf16, #tpu.memory_space<vmem>>, %arg4: memref<4x128xbf16, #tpu.memory_space<vmem>>, %arg5: memref<4x128xbf16, #tpu.memory_space<vmem>>, %arg6: memref<4x1xf32, #tpu.memory_space<vmem>>, %arg7: memref<128x128xbf16, #tpu.memory_space<vmem>>, %arg8: memref<1x4x256xf32, #tpu.memory_space<vmem>>) attributes {dimension_semantics = [#tpu.dimension_semantics<parallel>], iteration_bounds = array<i64: 2>, scalar_prefetch = 0 : i64, scratch_operands = 0 : i64, tpu.core_type = #tpu.core_type<tc>, window_params = [{transform_indices = @transform_0, window_bounds = array<i64: 1, 4, 256>}, {pipeline_mode = #tpu.pipeline_mode<synchronous>, transform_indices = @transform_1, window_bounds = array<i64: 4, 128>}, {pipeline_mode = #tpu.pipeline_mode<synchronous>, transform_indices = @transform_2, window_bounds = array<i64: 4, 128>}, {pipeline_mode = #tpu.pipeline_mode<synchronous>, transform_indices = @transform_3, window_bounds = array<i64: 4, 128>}, {pipeline_mode = #tpu.pipeline_mode<synchronous>, transform_indices = @transform_4, window_bounds = array<i64: 4, 128>}, {pipeline_mode = #tpu.pipeline_mode<synchronous>, transform_indices = @transform_5, window_bounds = array<i64: 4, 1>}, {pipeline_mode = #tpu.pipeline_mode<synchronous>, transform_indices = @transform_6, window_bounds = array<i64: 128, 128>}, {transform_indices = @transform_7, window_bounds = array<i64: 1, 4, 256>}]} {
    %c0 = arith.constant 0 : index
    %c0_0 = arith.constant 0 : index
    %0 = vector.load %arg2[%c0, %c0_0] : memref<4x128xbf16, #tpu.memory_space<vmem>>, vector<4x128xbf16>
    %c0_1 = arith.constant 0 : index
    %c0_2 = arith.constant 0 : index
    %1 = vector.load %arg3[%c0_1, %c0_2] : memref<4x128xbf16, #tpu.memory_space<vmem>>, vector<4x128xbf16>
    %c0_3 = arith.constant 0 : index
    %c0_4 = arith.constant 0 : index
    %2 = vector.load %arg4[%c0_3, %c0_4] : memref<4x128xbf16, #tpu.memory_space<vmem>>, vector<4x128xbf16>
    %c0_5 = arith.constant 0 : index
    %c0_6 = arith.constant 0 : index
    %3 = vector.load %arg5[%c0_5, %c0_6] : memref<4x128xbf16, #tpu.memory_space<vmem>>, vector<4x128xbf16>
    %c0_7 = arith.constant 0 : index
    %c0_8 = arith.constant 0 : index
    %4 = vector.load %arg6[%c0_7, %c0_8] : memref<4x1xf32, #tpu.memory_space<vmem>>, vector<4x1xf32>
    %c0_9 = arith.constant 0 : index
    %c0_10 = arith.constant 0 : index
    %5 = vector.load %arg7[%c0_9, %c0_10] : memref<128x128xbf16, #tpu.memory_space<vmem>>, vector<128x128xbf16>
    %c0_11 = arith.constant 0 : index
    %c0_12 = arith.constant 0 : index
    %c0_13 = arith.constant 0 : index
    %6 = vector.load %arg1[%c0_11, %c0_12, %c0_13] : memref<1x4x256xf32, #tpu.memory_space<vmem>>, vector<1x4x256xf32>
    %7 = vector.shape_cast %6 : vector<1x4x256xf32> to vector<4x256xf32>
    %8 = arith.truncf %7 : vector<4x256xf32> to vector<4x256xbf16>
    %cst = arith.constant dense<0.000000e+00> : vector<128x256xf32>
    %9 = tpu.matmul %1, %8, %cst {dimension_numbers = #tpu.dot_dimension_numbers<[0], [0], [1], [1], [0, 1, 1, 1], [], []>} : vector<4x128xbf16>, vector<4x256xbf16>, vector<128x256xf32> -> vector<128x256xf32>
    %cst_14 = arith.constant dense<0xFF800000> : vector<128xf32>
    %10 = vector.multi_reduction <maximumf>, %9, %cst_14 [1] : vector<128x256xf32> to vector<128xf32>
    %11 = vector.shape_cast %10 : vector<128xf32> to vector<128x1xf32>
    %12 = vector.broadcast %11 : vector<128x1xf32> to vector<128x256xf32>
    %13 = arith.subf %9, %12 : vector<128x256xf32>
    %14 = math.exp %13 : vector<128x256xf32>
    %cst_15 = arith.constant dense<0.000000e+00> : vector<128xf32>
    %15 = vector.multi_reduction <add>, %14, %cst_15 [1] : vector<128x256xf32> to vector<128xf32>
    %16 = vector.shape_cast %15 : vector<128xf32> to vector<128x1xf32>
    %cst_16 = arith.constant 1.000000e+00 : f32
    %17 = vector.broadcast %cst_16 : f32 to vector<128x1xf32>
    %18 = arith.divf %17, %16 : vector<128x1xf32>
    %19 = vector.broadcast %18 : vector<128x1xf32> to vector<128x256xf32>
    %20 = arith.mulf %14, %19 : vector<128x256xf32>
    %21 = arith.truncf %20 : vector<128x256xf32> to vector<128x256xbf16>
    %cst_17 = arith.constant dense<0.000000e+00> : vector<128x256xf32>
    %22 = tpu.matmul %2, %8, %cst_17 {dimension_numbers = #tpu.dot_dimension_numbers<[0], [0], [1], [1], [0, 1, 1, 1], [], []>} : vector<4x128xbf16>, vector<4x256xbf16>, vector<128x256xf32> -> vector<128x256xf32>
    %23 = arith.truncf %22 : vector<128x256xf32> to vector<128x256xbf16>
    %cst_18 = arith.constant dense<0.000000e+00> : vector<128x128xf32>
    %24 = tpu.matmul %21, %23, %cst_18 {dimension_numbers = #tpu.dot_dimension_numbers<[1], [1], [0], [0], [0, 0, 1, 0], [], []>} : vector<128x256xbf16>, vector<128x256xbf16>, vector<128x128xf32> -> vector<128x128xf32>
    %25 = arith.truncf %24 : vector<128x128xf32> to vector<128x128xbf16>
    %26 = arith.mulf %25, %5 : vector<128x128xbf16>
    %cst_19 = arith.constant dense<0.000000e+00> : vector<4x128xf32>
    %27 = tpu.matmul %3, %26, %cst_19 {dimension_numbers = #tpu.dot_dimension_numbers<[1], [1], [0], [0], [0, 0, 1, 0], [], []>} : vector<4x128xbf16>, vector<128x128xbf16>, vector<4x128xf32> -> vector<4x128xf32>
    %28 = arith.truncf %27 : vector<4x128xf32> to vector<4x128xbf16>
    %cst_20 = arith.constant dense<0.000000e+00> : vector<4x4xf32>
    %29 = tpu.matmul %28, %0, %cst_20 {dimension_numbers = #tpu.dot_dimension_numbers<[1], [1], [0], [0], [0, 0, 1, 0], [], []>} : vector<4x128xbf16>, vector<4x128xbf16>, vector<4x4xf32> -> vector<4x4xf32>
    %30 = arith.truncf %29 : vector<4x4xf32> to vector<4x4xbf16>
    %cst_21 = arith.constant dense<0.000000e+00> : vector<4x256xf32>
    %31 = tpu.matmul %30, %8, %cst_21 {dimension_numbers = #tpu.dot_dimension_numbers<[1], [0], [0], [1], [0, 0, 1, 1], [], []>} : vector<4x4xbf16>, vector<4x256xbf16>, vector<4x256xf32> -> vector<4x256xf32>
    %32 = vector.broadcast %4 : vector<4x1xf32> to vector<4x256xf32>
    %33 = arith.addf %31, %32 : vector<4x256xf32>
    %c0_22 = arith.constant 0 : index
    %c0_23 = arith.constant 0 : index
    %c0_24 = arith.constant 0 : index
    %34 = vector.load %arg8[%c0_22, %c0_23, %c0_24] : memref<1x4x256xf32, #tpu.memory_space<vmem>>, vector<1x4x256xf32>
    %35 = vector.shape_cast %34 : vector<1x4x256xf32> to vector<4x256xf32>
    %36 = vector.shape_cast %33 : vector<4x256xf32> to vector<1x4x256xf32>
    tpu.vector_store %arg8[%c0_22, %c0_23, %c0_24], %36 {strides = array<i32>} : memref<1x4x256xf32, #tpu.memory_space<vmem>>, vector<1x4x256xf32>,
    return
  }
  func.func @transform_0(%arg0: i32) -> (i32, i32, i32) {
    %c0_i32 = arith.constant 0 : i32
    %c0_i32_0 = arith.constant 0 : i32
    %c0_i32_1 = arith.constant 0 : i32
    return %arg0, %c0_i32, %c0_i32_0 : i32, i32, i32
  }
  func.func @transform_1(%arg0: i32) -> (i32, i32) {
    %c0_i32 = arith.constant 0 : i32
    %c0_i32_0 = arith.constant 0 : i32
    %c0_i32_1 = arith.constant 0 : i32
    return %c0_i32, %c0_i32_0 : i32, i32
  }
  func.func @transform_2(%arg0: i32) -> (i32, i32) {
    %c0_i32 = arith.constant 0 : i32
    %c0_i32_0 = arith.constant 0 : i32
    %c0_i32_1 = arith.constant 0 : i32
    return %c0_i32, %c0_i32_0 : i32, i32
  }
  func.func @transform_3(%arg0: i32) -> (i32, i32) {
    %c0_i32 = arith.constant 0 : i32
    %c0_i32_0 = arith.constant 0 : i32
    %c0_i32_1 = arith.constant 0 : i32
    return %c0_i32, %c0_i32_0 : i32, i32
  }
  func.func @transform_4(%arg0: i32) -> (i32, i32) {
    %c0_i32 = arith.constant 0 : i32
    %c0_i32_0 = arith.constant 0 : i32
    %c0_i32_1 = arith.constant 0 : i32
    return %c0_i32, %c0_i32_0 : i32, i32
  }
  func.func @transform_5(%arg0: i32) -> (i32, i32) {
    %c0_i32 = arith.constant 0 : i32
    %c0_i32_0 = arith.constant 0 : i32
    %c0_i32_1 = arith.constant 0 : i32
    return %c0_i32, %c0_i32_0 : i32, i32
  }
  func.func @transform_6(%arg0: i32) -> (i32, i32) {
    %c0_i32 = arith.constant 0 : i32
    %c0_i32_0 = arith.constant 0 : i32
    %c0_i32_1 = arith.constant 0 : i32
    return %c0_i32, %c0_i32_0 : i32, i32
  }
  func.func @transform_7(%arg0: i32) -> (i32, i32, i32) {
    %c0_i32 = arith.constant 0 : i32
    %c0_i32_0 = arith.constant 0 : i32
    %c0_i32_1 = arith.constant 0 : i32
    return %arg0, %c0_i32, %c0_i32_0 : i32, i32, i32
  }
}

</mosaic_0001>

<llo_original>
// kernel: tpu_custom_call.1
$region0: #{tpu_custom_call.1}
  #allocation0 [shape = 'u32[]', space=smem, size = 0x4, offset = 0x4, fixed_abs, tag = 'smem constant byte address 0x4 - core index']
  #allocation1 [shape = 'u32[144,128]{1,0:T(1,128)}', space=vmem, size = 0x12000, scoped, tag = 'internal scratch']
  %s0 = inlined_call_operand.hbm [shape: f32[2,4,256], index: 0, kind: input, shape index: {}]
  %s1 = inlined_call_operand.vmem [shape: bf16[4,128], index: 1, kind: input, shape index: {}]
  %s2 = inlined_call_operand.vmem [shape: bf16[4,128], index: 2, kind: input, shape index: {}]
  %s3 = inlined_call_operand.vmem [shape: bf16[4,128], index: 3, kind: input, shape index: {}]
  %s4 = inlined_call_operand.vmem [shape: bf16[4,128], index: 4, kind: input, shape index: {}]
  %s5 = inlined_call_operand.vmem [shape: f32[4,1], index: 5, kind: input, shape index: {}]
  %s6 = inlined_call_operand.hbm [shape: bf16[128,128], index: 6, kind: input, shape index: {}]
  %s7 = inlined_call_operand.hbm [shape: f32[2,4,256], index: 7, kind: output, shape index: {}]
  %s8 = sld [smem:[#allocation0]]
  $region69: #{tpu_custom_call.1} parent=0
    _
  %s10 = ssub.s32 1, %s8
  %s11 = scalar_select 0, %s10, %s8
  $region1: #{tpu_custom_call.1} parent=0
    #allocation2 [shape = 'u8[8192]{0}', space=vmem, size = 0x2000, scoped, tag = 'input window, operand 0']
    #allocation3 [shape = 's32[2]{0}', space=sflag, size = 0x8, scoped, tag = 'scoped memory for tpu_custom_call.1']
    #allocation4 [shape = 's32[2]{0}', space=sflag, size = 0x8, scoped, tag = 'scoped memory for tpu_custom_call.1']
    #allocation5 [shape = 'u8[32768]{0}', space=vmem, size = 0x8000, scoped, tag = 'input window, operand 6, single buffered']
    #allocation6 [shape = 's32[1]{0}', space=sflag, size = 0x4, scoped, tag = 'scoped memory for tpu_custom_call.1']
    #allocation7 [shape = 'u8[8192]{0}', space=vmem, size = 0x2000, scoped, tag = 'output window, operand 0']
    %12 = vsyncpa [#allocation3], 0
    %s13 = scalar_lea.sflag [#allocation3], 1
    %14 = vsyncpa %s13, 0
    %15 = vsyncpa [#allocation6], 0
    %16 = vsyncpa [#allocation4], 0
    %s17 = scalar_lea.sflag [#allocation4], 1
    %18 = vsyncpa %s17, 0
    loop: start=0, step=1, limit=4
    $region2: #{tpu_custom_call.1} parent=1 // loop_pre_header
      _
    $region3: #{tpu_custom_call.1} parent=1 // loop_header
      %s20 = sphi 0, %s24
      %p21 = scmp.ge.s32.totalorder %s20, 4
      %s30 = sphi 0, %s32
      %s33 = sphi 0, %s30
      %s34 = sphi 0, %s33
      %s50 = sphi 0, %s34
      %s54 = sphi 0, %s54
      %s56 = sphi 0, %s54
      %s57 = sphi 0, %s56
      %s71 = sphi 0, %s57
      %s75 = sphi 0, %s75
      %s77 = sphi 0, %s75
      %s78 = sphi 0, %s77
      %s92 = sphi 0, %s78
      %s96 = sphi 0, %s96
      %s98 = sphi 0, %s96
      %s99 = sphi 0, %s98
      %s113 = sphi 0, %s99
      %s117 = sphi 0, %s117
      %s119 = sphi 0, %s117
      %s120 = sphi 0, %s119
      %s134 = sphi 0, %s120
      %s138 = sphi 0, %s138
      %s140 = sphi 0, %s138
      %s141 = sphi 0, %s140
      %s155 = sphi 0, %s141
      %s159 = sphi 0, %s159
      %s161 = sphi 0, %s159
      %s162 = sphi 0, %s161
      %s176 = sphi 0, %s162
      %s182 = sphi 0, %s184
      %s185 = sphi 0, %s182
      %s186 = sphi 0, %s185
      %s202 = sphi 0, %s186
    $region4: #{tpu_custom_call.1} parent=1 // loop_header_branch
      %23 = sbr.rel (%p21) target = $region8
    $region5: #{tpu_custom_call.1} parent=1 // loop_body
      %s25 = ssub.s32 %s20, 1
      %s26 = ssub.s32 %s20, 2
      %s27 = sadd.s32 %s20, 1
      %s28 = ssub.s32 %s20, %s27
      %p29 = scmp.eq.s32.totalorder %s28, 0
      %s31 = sadd.s32 %s30, 1
      %s32 = scalar_select %p29, %s30, %s31
      %p35 = pneg %p29
      %p36 = scmp.eq.s32.totalorder %s20, 1
      %p37 = por %p35, %p36
      %p38 = scmp.ne.s32.totalorder %s30, %s33
      %p39 = scmp.eq.s32.totalorder %s20, 0
      %p40 = por %p38, %p39
      %p41 = scmp.ne.s32.totalorder %s30, %s33
      %p42 = scmp.eq.s32.totalorder %s25, 1
      %p43 = por %p41, %p42
      %p44 = scmp.ne.s32.totalorder %s33, %s34
      %p45 = scmp.eq.s32.totalorder %s25, 0
      %p46 = por %p44, %p45
      %p47 = scmp.ne.s32.totalorder %s33, %s34
      %p48 = scmp.eq.s32.totalorder %s26, 1
      %p49 = por %p47, %p48
      %p51 = scmp.ne.s32.totalorder %s34, %s50
      %p52 = scmp.eq.s32.totalorder %s26, 0
      %p53 = por %p51, %p52
      %s55 = sadd.s32 %s54, 1
      %p58 = scmp.eq.s32.totalorder %s20, 1
      %p59 = scmp.ne.s32.totalorder %s54, %s56
      %p60 = scmp.eq.s32.totalorder %s20, 0
      %p61 = por %p59, %p60
      %p62 = scmp.ne.s32.totalorder %s54, %s56
      %p63 = scmp.eq.s32.totalorder %s25, 1
      %p64 = por %p62, %p63
      %p65 = scmp.ne.s32.totalorder %s56, %s57
      %p66 = scmp.eq.s32.totalorder %s25, 0
      %p67 = por %p65, %p66
      %p68 = scmp.ne.s32.totalorder %s56, %s57
      %p69 = scmp.eq.s32.totalorder %s26, 1
      %p70 = por %p68, %p69
      %p72 = scmp.ne.s32.totalorder %s57, %s71
      %p73 = scmp.eq.s32.totalorder %s26, 0
      %p74 = por %p72, %p73
      %s76 = sadd.s32 %s75, 1
      %p79 = scmp.eq.s32.totalorder %s20, 1
      %p80 = scmp.ne.s32.totalorder %s75, %s77
      %p81 = scmp.eq.s32.totalorder %s20, 0
      %p82 = por %p80, %p81
      %p83 = scmp.ne.s32.totalorder %s75, %s77
      %p84 = scmp.eq.s32.totalorder %s25, 1
      %p85 = por %p83, %p84
      %p86 = scmp.ne.s32.totalorder %s77, %s78
      %p87 = scmp.eq.s32.totalorder %s25, 0
      %p88 = por %p86, %p87
      %p89 = scmp.ne.s32.totalorder %s77, %s78
      %p90 = scmp.eq.s32.totalorder %s26, 1
      %p91 = por %p89, %p90
      %p93 = scmp.ne.s32.totalorder %s78, %s92
      %p94 = scmp.eq.s32.totalorder %s26, 0
      %p95 = por %p93, %p94
      %s97 = sadd.s32 %s96, 1
      %p100 = scmp.eq.s32.totalorder %s20, 1
      %p101 = scmp.ne.s32.totalorder %s96, %s98
      %p102 = scmp.eq.s32.totalorder %s20, 0
      %p103 = por %p101, %p102
      %p104 = scmp.ne.s32.totalorder %s96, %s98
      %p105 = scmp.eq.s32.totalorder %s25, 1
      %p106 = por %p104, %p105
      %p107 = scmp.ne.s32.totalorder %s98, %s99
      %p108 = scmp.eq.s32.totalorder %s25, 0
      %p109 = por %p107, %p108
      %p110 = scmp.ne.s32.totalorder %s98, %s99
      %p111 = scmp.eq.s32.totalorder %s26, 1
      %p112 = por %p110, %p111
      %p114 = scmp.ne.s32.totalorder %s99, %s113
      %p115 = scmp.eq.s32.totalorder %s26, 0
      %p116 = por %p114, %p115
      %s118 = sadd.s32 %s117, 1
      %p121 = scmp.eq.s32.totalorder %s20, 1
      %p122 = scmp.ne.s32.totalorder %s117, %s119
      %p123 = scmp.eq.s32.totalorder %s20, 0
      %p124 = por %p122, %p123
      %p125 = scmp.ne.s32.totalorder %s117, %s119
      %p126 = scmp.eq.s32.totalorder %s25, 1
      %p127 = por %p125, %p126
      %p128 = scmp.ne.s32.totalorder %s119, %s120
      %p129 = scmp.eq.s32.totalorder %s25, 0
      %p130 = por %p128, %p129
      %p131 = scmp.ne.s32.totalorder %s119, %s120
      %p132 = scmp.eq.s32.totalorder %s26, 1
      %p133 = por %p131, %p132
      %p135 = scmp.ne.s32.totalorder %s120, %s134
      %p136 = scmp.eq.s32.totalorder %s26, 0
      %p137 = por %p135, %p136
      %s139 = sadd.s32 %s138, 1
      %p142 = scmp.eq.s32.totalorder %s20, 1
      %p143 = scmp.ne.s32.totalorder %s138, %s140
      %p144 = scmp.eq.s32.totalorder %s20, 0
      %p145 = por %p143, %p144
      %p146 = scmp.ne.s32.totalorder %s138, %s140
      %p147 = scmp.eq.s32.totalorder %s25, 1
      %p148 = por %p146, %p147
      %p149 = scmp.ne.s32.totalorder %s140, %s141
      %p150 = scmp.eq.s32.totalorder %s25, 0
      %p151 = por %p149, %p150
      %p152 = scmp.ne.s32.totalorder %s140, %s141
      %p153 = scmp.eq.s32.totalorder %s26, 1
      %p154 = por %p152, %p153
      %p156 = scmp.ne.s32.totalorder %s141, %s155
      %p157 = scmp.eq.s32.totalorder %s26, 0
      %p158 = por %p156, %p157
      %s160 = sadd.s32 %s159, 1
      %p163 = scmp.eq.s32.totalorder %s20, 1
      %p164 = scmp.ne.s32.totalorder %s159, %s161
      %p165 = scmp.eq.s32.totalorder %s20, 0
      %p166 = por %p164, %p165
      %p167 = scmp.ne.s32.totalorder %s159, %s161
      %p168 = scmp.eq.s32.totalorder %s25, 1
      %p169 = por %p167, %p168
      %p170 = scmp.ne.s32.totalorder %s161, %s162
      %p171 = scmp.eq.s32.totalorder %s25, 0
      %p172 = por %p170, %p171
      %p173 = scmp.ne.s32.totalorder %s161, %s162
      %p174 = scmp.eq.s32.totalorder %s26, 1
      %p175 = por %p173, %p174
      %p177 = scmp.ne.s32.totalorder %s162, %s176
      %p178 = scmp.eq.s32.totalorder %s26, 0
      %p179 = por %p177, %p178
      %s180 = ssub.s32 %s20, %s27
      %p181 = scmp.eq.s32.totalorder %s180, 0
      %s183 = sadd.s32 %s182, 1
      %s184 = scalar_select %p181, %s182, %s183
      %p187 = pneg %p181
      %p188 = scmp.eq.s32.totalorder %s20, 1
      %p189 = por %p187, %p188
      %p190 = scmp.ne.s32.totalorder %s182, %s185
      %p191 = scmp.eq.s32.totalorder %s20, 0
      %p192 = por %p190, %p191
      %p193 = scmp.ne.s32.totalorder %s182, %s185
      %p194 = scmp.eq.s32.totalorder %s25, 1
      %p195 = por %p193, %p194
      %p196 = scmp.ne.s32.totalorder %s185, %s186
      %p197 = scmp.eq.s32.totalorder %s25, 0
      %p198 = por %p196, %p197
      %p199 = scmp.ne.s32.totalorder %s185, %s186
      %p200 = scmp.eq.s32.totalorder %s26, 1
      %p201 = por %p199, %p200
      %p203 = scmp.ne.s32.totalorder %s186, %s202
      %p204 = scmp.eq.s32.totalorder %s26, 0
      %p205 = por %p203, %p204
      %p206 = scmp.le.s32.totalorder 1, %s20
      %p207 = scmp.lt.s32.totalorder %s20, 3
      %p208 = pnand %p206, %p207
      %p209 = pneg %p208
      // Predicated region
      $region9: #{tpu_custom_call.1} parent=5 // pred_check
        _
      $region10: #{tpu_custom_call.1} parent=5 // pred_check_branch
        %211 = sbr.rel (%p208) target = $region12
      $region11: #{tpu_custom_call.1} parent=5 // pred_region
        %s212 = ssub.s32 %s20, 1
        // Predicated region
        $region13: #{tpu_custom_call.1} parent=11 // pred_check
          %p213 = pneg %p67
        $region14: #{tpu_custom_call.1} parent=11 // pred_check_branch
          %215 = sbr.rel (%p213) target = $region16
        $region15: #{tpu_custom_call.1} parent=11 // pred_region
          _
        $region16: #{tpu_custom_call.1} parent=11 // pred_fallthru
          _
        // Predicated region
        $region17: #{tpu_custom_call.1} parent=11 // pred_check
          %p216 = pneg %p88
        $region18: #{tpu_custom_call.1} parent=11 // pred_check_branch
          %218 = sbr.rel (%p216) target = $region20
        $region19: #{tpu_custom_call.1} parent=11 // pred_region
          _
        $region20: #{tpu_custom_call.1} parent=11 // pred_fallthru
          _
        // Predicated region
        $region21: #{tpu_custom_call.1} parent=11 // pred_check
          %p219 = pneg %p109
        $region22: #{tpu_custom_call.1} parent=11 // pred_check_branch
          %221 = sbr.rel (%p219) target = $region24
        $region23: #{tpu_custom_call.1} parent=11 // pred_region
          _
        $region24: #{tpu_custom_call.1} parent=11 // pred_fallthru
          _
        // Predicated region
        $region25: #{tpu_custom_call.1} parent=11 // pred_check
          %p222 = pneg %p130
        $region26: #{tpu_custom_call.1} parent=11 // pred_check_branch
          %224 = sbr.rel (%p222) target = $region28
        $region27: #{tpu_custom_call.1} parent=11 // pred_region
          _
        $region28: #{tpu_custom_call.1} parent=11 // pred_fallthru
          _
        // Predicated region
        $region29: #{tpu_custom_call.1} parent=11 // pred_check
          %p225 = pneg %p151
        $region30: #{tpu_custom_call.1} parent=11 // pred_check_branch
          %227 = sbr.rel (%p225) target = $region32
        $region31: #{tpu_custom_call.1} parent=11 // pred_region
          _
        $region32: #{tpu_custom_call.1} parent=11 // pred_fallthru
          _
        // Predicated region
        $region33: #{tpu_custom_call.1} parent=11 // pred_check
          %p228 = pneg %p172
        $region34: #{tpu_custom_call.1} parent=11 // pred_check_branch
          %230 = sbr.rel (%p228) target = $region36
        $region35: #{tpu_custom_call.1} parent=11 // pred_region
          %s232 = ssub.s32 1024, 1024
          %233 = vsyncadd [#allocation6], %s232
          %s234 = sshll.u32 [#allocation5], 4
          %s235 = int_to_ptr.vmem [resolvable:$true] %s234
          %240 = dma.hbm_to_vmem [thread:$0]  %s6, 1024, %s235, [#allocation6], 64, 64, 4
        $region36: #{tpu_custom_call.1} parent=11 // pred_fallthru
          _
      $region12: #{tpu_custom_call.1} parent=5 // pred_fallthru
        _
      %p241 = scmp.lt.s32.totalorder %s20, 2
      // Predicated region
      $region37: #{tpu_custom_call.1} parent=5 // pred_check
        %p242 = pneg %p241
      $region38: #{tpu_custom_call.1} parent=5 // pred_check_branch
        %244 = sbr.rel (%p242) target = $region40
      $region39: #{tpu_custom_call.1} parent=5 // pred_region
        // Predicated region
        $region41: #{tpu_custom_call.1} parent=39 // pred_check
          %p245 = pneg %p40
        $region42: #{tpu_custom_call.1} parent=39 // pred_check_branch
          %247 = sbr.rel (%p245) target = $region44
        $region43: #{tpu_custom_call.1} parent=39 // pred_region
          %s248 = sand.u32 %s30, 1
          %s249 = scalar_lea.sflag [#allocation3], %s248
          %s250 = sand.u32 %s30, 1
          %s251 = smul.addr %s250, 8
          %s252 = scalar_lea.vmem [#allocation2], %s251
          %s254 = ssub.s32 128, 128
          %255 = vsyncadd %s249, %s254
          %s256 = smul.addr %s20, 2
          %s257 = smul.addr %s256, 64
          %s258 = scalar_lea.hbm %s0, %s257
          %s260 = sshll.u32 %s252, 4
          %s261 = int_to_ptr.vmem [resolvable:$true] %s260
          %263 = dma.hbm_to_vmem [thread:$0]  %s258, 128, %s261, %s249
        $region44: #{tpu_custom_call.1} parent=39 // pred_fallthru
          _
      $region40: #{tpu_custom_call.1} parent=5 // pred_fallthru
        _
      %p264 = scmp.le.s32.totalorder 1, %s20
      %p265 = scmp.lt.s32.totalorder %s20, 3
      %p266 = pnand %p264, %p265
      %p267 = pneg %p266
      // Predicated region
      $region45: #{tpu_custom_call.1} parent=5 // pred_check
        _
      $region46: #{tpu_custom_call.1} parent=5 // pred_check_branch
        %269 = sbr.rel (%p266) target = $region48
      $region47: #{tpu_custom_call.1} parent=5 // pred_region
        %s270 = ssub.s32 %s20, 1
        %s271 = sand.u32 %s33, 1
        %s272 = scalar_lea.sflag [#allocation3], %s271
        %s273 = sand.u32 %s33, 1
        %s274 = smul.addr %s273, 8
        %s275 = scalar_lea.vmem [#allocation2], %s274
        // Predicated region
        $region49: #{tpu_custom_call.1} parent=47 // pred_check
          %p276 = pneg %p46
        $region50: #{tpu_custom_call.1} parent=47 // pred_check_branch
          %278 = sbr.rel (%p276) target = $region52
        $region51: #{tpu_custom_call.1} parent=47 // pred_region
          %279 = dma.done %s272, 128
        $region52: #{tpu_custom_call.1} parent=47 // pred_fallthru
          _
        // Predicated region
        $region53: #{tpu_custom_call.1} parent=47 // pred_check
          %p280 = pneg %p172
        $region54: #{tpu_custom_call.1} parent=47 // pred_check_branch
          %282 = sbr.rel (%p280) target = $region56
        $region55: #{tpu_custom_call.1} parent=47 // pred_region
          %283 = dma.done [#allocation6], 1024
        $region56: #{tpu_custom_call.1} parent=47 // pred_fallthru
          _
        %s284 = sand.u32 %s33, 1
        %s285 = scalar_lea.sflag [#allocation3], %s284
        %s286 = sand.u32 %s33, 1
        %s287 = smul.addr %s286, 8
        %s288 = scalar_lea.vmem [#allocation2], %s287
        %p289 = pneg %p46
        %p290 = pneg %p43
        %p291 = pneg %p67
        %p292 = pneg %p64
        %p293 = pneg %p88
        %p294 = pneg %p85
        %p295 = pneg %p109
        %p296 = pneg %p106
        %p297 = pneg %p130
        %p298 = pneg %p127
        %p299 = pneg %p151
        %p300 = pneg %p148
        %p301 = pneg %p172
        %p302 = pneg %p169
        %p303 = pneg %p198
        %p304 = pneg %p195
        %s305 = sand.u32 %s185, 1
        %s306 = scalar_lea.sflag [#allocation4], %s305
        %s307 = sand.u32 %s185, 1
        %s308 = smul.addr %s307, 8
        %s309 = scalar_lea.vmem [#allocation7], %s308
        %v311 = vld [vmem:[%s1] sm:$0x3]
        %v312 = vld [vmem:[%s2] sm:$0x3]
        %v313 = vld [vmem:[%s3] sm:$0x3]
        %v314 = vld [vmem:[%s4] sm:$0x3]
        %v315 = vld [vmem:[%s5] sm:$0xf]
        %v316 = vld [vmem:[#allocation5] sm:$0xf]
        %v317 = vld [vmem:[#allocation5 + $0x4] sm:$0xf]
        %v318 = vld [vmem:[#allocation5 + $0x8] sm:$0xf]
        %v319 = vld [vmem:[#allocation5 + $0xc] sm:$0xf]
        %v320 = vld [vmem:[#allocation5 + $0x10] sm:$0xf]
        %v321 = vld [vmem:[#allocation5 + $0x14] sm:$0xf]
        %v322 = vld [vmem:[#allocation5 + $0x18] sm:$0xf]
        %v323 = vld [vmem:[#allocation5 + $0x1c] sm:$0xf]
        %v324 = vld [vmem:[#allocation5 + $0x20] sm:$0xf]
        %v325 = vld [vmem:[#allocation5 + $0x24] sm:$0xf]
        %v326 = vld [vmem:[#allocation5 + $0x28] sm:$0xf]
        %v327 = vld [vmem:[#allocation5 + $0x2c] sm:$0xf]
        %v328 = vld [vmem:[#allocation5 + $0x30] sm:$0xf]
        %v329 = vld [vmem:[#allocation5 + $0x34] sm:$0xf]
        %v330 = vld [vmem:[#allocation5 + $0x38] sm:$0xf]
        %v331 = vld [vmem:[#allocation5 + $0x3c] sm:$0xf]
        %v332 = vld [vmem:[%s275] sm:$0xff]
        %v334 = vcombine.high %v332, %v332
        %v336 = vpack.c.bf16 %v332, %v332
        %v337 = vpack.c.bf16 %v334, %v334
        %338 = vxpose.xlu0.c.b16.start [1/8] %v312, 128
        %339 = vxpose.xlu0.c.b16.cont [2/8] 0, 128
        %340 = vxpose.xlu0.c.b16.cont [3/8] 0, 128
        %341 = vxpose.xlu0.c.b16.cont [4/8] 0, 128
        %342 = vxpose.xlu0.c.b16.cont [5/8] 0, 128
        %343 = vxpose.xlu0.c.b16.cont [6/8] 0, 128
        %344 = vxpose.xlu0.c.b16.cont [7/8] 0, 128
        %345 = vxpose.xlu0.c.b16.end [8/8] 0, 128
        %v346 = vpop.trf.xlu0
        %v347 = vpop.trf.xlu0
        %v348 = vpop.trf.xlu0
        %v349 = vpop.trf.xlu0
        %v350 = vpop.trf.xlu0
        %v351 = vpop.trf.xlu0
        %v352 = vpop.trf.xlu0
        %v353 = vpop.trf.xlu0
        %vm354 = vcmask 31744
        %v356 = vsel %vm354, %v346, 0
        %v359 = vsel %vm354, %v347, 0
        %v362 = vsel %vm354, %v348, 0
        %v365 = vsel %vm354, %v349, 0
        %v368 = vsel %vm354, %v350, 0
        %v371 = vsel %vm354, %v351, 0
        %v374 = vsel %vm354, %v352, 0
        %v377 = vsel %vm354, %v353, 0
        %vm379 = vcmask 1041408
        %v381 = vsel %vm379, %v336, 0
        %v384 = vsel %vm379, %v337, 0
        %386 = vmatprep.subr.bf16.mxu0 0
        %387 = vmatpush1.bf16.msra.mxu0 0
        %388 = vmatprep.subr.bf16.mxu0 0
        %389 = vmatpush1.bf16.msra.mxu0 0
        %390 = vmatprep.subr.bf16.mxu0 0
        %391 = vmatpush1.bf16.msra.mxu0 0
        %392 = vmatprep.subr.bf16.mxu0 0
        %393 = vmatpush1.bf16.msra.mxu0 0
        %394 = vmatprep.subr.bf16.mxu0 0
        %395 = vmatpush1.bf16.msra.mxu0 0
        %396 = vmatprep.subr.bf16.mxu0 0
        %397 = vmatpush1.bf16.msra.mxu0 0
        %398 = vmatprep.subr.bf16.mxu0 0
        %399 = vmatpush1.bf16.msra.mxu0 0
        %400 = vmatprep.subr.bf16.mxu0 %v384
        %401 = vmatpush1.bf16.msra.mxu0 %v381
        %402 = vmatprep.subr.bf16.mxu0 0
        %403 = vmatpush2.bf16.msra.mxu0 0
        %404 = vmatprep.subr.bf16.mxu0 0
        %405 = vmatpush2.bf16.msra.mxu0 0
        %406 = vmatprep.subr.bf16.mxu0 0
        %407 = vmatpush2.bf16.msra.mxu0 0
        %408 = vmatprep.subr.bf16.mxu0 0
        %409 = vmatpush2.bf16.msra.mxu0 0
        %410 = vmatprep.subr.bf16.mxu0 0
        %411 = vmatpush2.bf16.msra.mxu0 0
        %412 = vmatprep.subr.bf16.mxu0 0
        %413 = vmatpush2.bf16.msra.mxu0 0
        %414 = vmatprep.subr.bf16.mxu0 0
        %415 = vmatpush2.bf16.msra.mxu0 0
        %416 = vmatprep.subr.bf16.mxu0 0
        %417 = vmatpush2.bf16.msra.mxu0 0
        %418 = vmatprep.mubr.bf16.mxu0 0
        %419 = vmatmul.mubr.bf16.gmra.mxu0 %v356
        %v420 = vpop.f32.mrf.mxu0
        %v421 = vadd.f32 0.0, %v420
        %v422 = vpop.f32.mrf.mxu0
        %v423 = vadd.f32 0.0, %v422
        %v424 = vpop.f32.mrf.mxu0
        %v425 = vadd.f32 0.0, %v424
        %v426 = vpop.f32.mrf.mxu0
        %v427 = vadd.f32 0.0, %v426
        %428 = vmatprep.mubr.bf16.mxu0 0
        %429 = vmatmul.mubr.bf16.gmra.mxu0 %v359
        %v430 = vpop.f32.mrf.mxu0
        %v431 = vadd.f32 0.0, %v430
        %v432 = vpop.f32.mrf.mxu0
        %v433 = vadd.f32 0.0, %v432
        %v434 = vpop.f32.mrf.mxu0
        %v435 = vadd.f32 0.0, %v434
        %v436 = vpop.f32.mrf.mxu0
        %v437 = vadd.f32 0.0, %v436
        %438 = vmatprep.mubr.bf16.mxu0 0
        %439 = vmatmul.mubr.bf16.gmra.mxu0 %v362
        %v440 = vpop.f32.mrf.mxu0
        %v441 = vadd.f32 0.0, %v440
        %v442 = vpop.f32.mrf.mxu0
        %v443 = vadd.f32 0.0, %v442
        %v444 = vpop.f32.mrf.mxu0
        %v445 = vadd.f32 0.0, %v444
        %v446 = vpop.f32.mrf.mxu0
        %v447 = vadd.f32 0.0, %v446
        %448 = vmatprep.mubr.bf16.mxu0 0
        %449 = vmatmul.mubr.bf16.gmra.mxu0 %v365
        %v450 = vpop.f32.mrf.mxu0
        %v451 = vadd.f32 0.0, %v450
        %v452 = vpop.f32.mrf.mxu0
        %v453 = vadd.f32 0.0, %v452
        %v454 = vpop.f32.mrf.mxu0
        %v455 = vadd.f32 0.0, %v454
        %v456 = vpop.f32.mrf.mxu0
        %v457 = vadd.f32 0.0, %v456
        %458 = vmatprep.mubr.bf16.mxu0 0
        %459 = vmatmul.mubr.bf16.gmra.mxu0 %v368
        %v460 = vpop.f32.mrf.mxu0
        %v461 = vadd.f32 0.0, %v460
        %v462 = vpop.f32.mrf.mxu0
        %v463 = vadd.f32 0.0, %v462
        %v464 = vpop.f32.mrf.mxu0
        %v465 = vadd.f32 0.0, %v464
        %v466 = vpop.f32.mrf.mxu0
        %v467 = vadd.f32 0.0, %v466
        %468 = vmatprep.mubr.bf16.mxu0 0
        %469 = vmatmul.mubr.bf16.gmra.mxu0 %v371
        %v470 = vpop.f32.mrf.mxu0
        %v471 = vadd.f32 0.0, %v470
        %v472 = vpop.f32.mrf.mxu0
        %v473 = vadd.f32 0.0, %v472
        %v474 = vpop.f32.mrf.mxu0
        %v475 = vadd.f32 0.0, %v474
        %v476 = vpop.f32.mrf.mxu0
        %v477 = vadd.f32 0.0, %v476
        %478 = vmatprep.mubr.bf16.mxu0 0
        %479 = vmatmul.mubr.bf16.gmra.mxu0 %v374
        %v480 = vpop.f32.mrf.mxu0
        %v481 = vadd.f32 0.0, %v480
        %v482 = vpop.f32.mrf.mxu0
        %v483 = vadd.f32 0.0, %v482
        %v484 = vpop.f32.mrf.mxu0
        %v485 = vadd.f32 0.0, %v484
        %v486 = vpop.f32.mrf.mxu0
        %v487 = vadd.f32 0.0, %v486
        %488 = vmatprep.mubr.bf16.mxu0 0
        %489 = vmatmul.mubr.bf16.gmra.mxu0 %v377
        %v490 = vpop.f32.mrf.mxu0
        %v491 = vadd.f32 0.0, %v490
        %v492 = vpop.f32.mrf.mxu0
        %v493 = vadd.f32 0.0, %v492
        %v494 = vpop.f32.mrf.mxu0
        %v495 = vadd.f32 0.0, %v494
        %v496 = vpop.f32.mrf.mxu0
        %v497 = vadd.f32 0.0, %v496
        %498 = vdwg.mxu0
        %v499 = vmax.f32 %v421, %v423
        %500 = vmax.xlane.f32.xlu0 %v499
        %v501 = vpop.xlane.xlu0 %500
        %v502 = vmax.f32 %v425, %v427
        %503 = vmax.xlane.f32.xlu0 %v502
        %v504 = vpop.xlane.xlu0 %503
        %v505 = vmax.f32 %v431, %v433
        %506 = vmax.xlane.f32.xlu0 %v505
        %v507 = vpop.xlane.xlu0 %506
        %v508 = vmax.f32 %v435, %v437
        %509 = vmax.xlane.f32.xlu0 %v508
        %v510 = vpop.xlane.xlu0 %509
        %v511 = vmax.f32 %v441, %v443
        %512 = vmax.xlane.f32.xlu0 %v511
        %v513 = vpop.xlane.xlu0 %512
        %v514 = vmax.f32 %v445, %v447
        %515 = vmax.xlane.f32.xlu0 %v514
        %v516 = vpop.xlane.xlu0 %515
        %v517 = vmax.f32 %v451, %v453
        %518 = vmax.xlane.f32.xlu0 %v517
        %v519 = vpop.xlane.xlu0 %518
        %v520 = vmax.f32 %v455, %v457
        %521 = vmax.xlane.f32.xlu0 %v520
        %v522 = vpop.xlane.xlu0 %521
        %v523 = vmax.f32 %v461, %v463
        %524 = vmax.xlane.f32.xlu0 %v523
        %v525 = vpop.xlane.xlu0 %524
        %v526 = vmax.f32 %v465, %v467
        %527 = vmax.xlane.f32.xlu0 %v526
        %v528 = vpop.xlane.xlu0 %527
        %v529 = vmax.f32 %v471, %v473
        %530 = vmax.xlane.f32.xlu0 %v529
        %v531 = vpop.xlane.xlu0 %530
        %v532 = vmax.f32 %v475, %v477
        %533 = vmax.xlane.f32.xlu0 %v532
        %v534 = vpop.xlane.xlu0 %533
        %v535 = vmax.f32 %v481, %v483
        %536 = vmax.xlane.f32.xlu0 %v535
        %v537 = vpop.xlane.xlu0 %536
        %v538 = vmax.f32 %v485, %v487
        %539 = vmax.xlane.f32.xlu0 %v538
        %v540 = vpop.xlane.xlu0 %539
        %v541 = vmax.f32 %v491, %v493
        %542 = vmax.xlane.f32.xlu0 %v541
        %v543 = vpop.xlane.xlu0 %542
        %v544 = vmax.f32 %v495, %v497
        %545 = vmax.xlane.f32.xlu0 %v544
        %v546 = vpop.xlane.xlu0 %545
        %v547 = vsub.f32 %v421, %v501
        %v548 = vsub.f32 %v423, %v501
        %v549 = vsub.f32 %v425, %v504
        %v550 = vsub.f32 %v427, %v504
        %v551 = vsub.f32 %v431, %v507
        %v552 = vsub.f32 %v433, %v507
        %v553 = vsub.f32 %v435, %v510
        %v554 = vsub.f32 %v437, %v510
        %v555 = vsub.f32 %v441, %v513
        %v556 = vsub.f32 %v443, %v513
        %v557 = vsub.f32 %v445, %v516
        %v558 = vsub.f32 %v447, %v516
        %v559 = vsub.f32 %v451, %v519
        %v560 = vsub.f32 %v453, %v519
        %v561 = vsub.f32 %v455, %v522
        %v562 = vsub.f32 %v457, %v522
        %v563 = vsub.f32 %v461, %v525
        %v564 = vsub.f32 %v463, %v525
        %v565 = vsub.f32 %v465, %v528
        %v566 = vsub.f32 %v467, %v528
        %v567 = vsub.f32 %v471, %v531
        %v568 = vsub.f32 %v473, %v531
        %v569 = vsub.f32 %v475, %v534
        %v570 = vsub.f32 %v477, %v534
        %v571 = vsub.f32 %v481, %v537
        %v572 = vsub.f32 %v483, %v537
        %v573 = vsub.f32 %v485, %v540
        %v574 = vsub.f32 %v487, %v540
        %v575 = vsub.f32 %v491, %v543
        %v576 = vsub.f32 %v493, %v543
        %v577 = vsub.f32 %v495, %v546
        %v578 = vsub.f32 %v497, %v546
        %v579 = vmul.f32 %v547, 1.442695
        %v580 = vpow.pop %v579
        %v581 = vmul.f32 %v548, 1.442695
        %v582 = vpow.pop %v581
        %v583 = vmul.f32 %v549, 1.442695
        %v584 = vpow.pop %v583
        %v585 = vmul.f32 %v550, 1.442695
        %v586 = vpow.pop %v585
        %v587 = vmul.f32 %v551, 1.442695
        %v588 = vpow.pop %v587
        %v589 = vmul.f32 %v552, 1.442695
        %v590 = vpow.pop %v589
        %v591 = vmul.f32 %v553, 1.442695
        %v592 = vpow.pop %v591
        %v593 = vmul.f32 %v554, 1.442695
        %v594 = vpow.pop %v593
        %v595 = vmul.f32 %v555, 1.442695
        %v596 = vpow.pop %v595
        %v597 = vmul.f32 %v556, 1.442695
        %v598 = vpow.pop %v597
        %v599 = vmul.f32 %v557, 1.442695
        %v600 = vpow.pop %v599
        %v601 = vmul.f32 %v558, 1.442695
        %v602 = vpow.pop %v601
        %v603 = vmul.f32 %v559, 1.442695
        %v604 = vpow.pop %v603
        %v605 = vmul.f32 %v560, 1.442695
        %v606 = vpow.pop %v605
        %v607 = vmul.f32 %v561, 1.442695
        %v608 = vpow.pop %v607
        %v609 = vmul.f32 %v562, 1.442695
        %v610 = vpow.pop %v609
        %v611 = vmul.f32 %v563, 1.442695
        %v612 = vpow.pop %v611
        %v613 = vmul.f32 %v564, 1.442695
        %v614 = vpow.pop %v613
        %v615 = vmul.f32 %v565, 1.442695
        %v616 = vpow.pop %v615
        %v617 = vmul.f32 %v566, 1.442695
        %v618 = vpow.pop %v617
        %v619 = vmul.f32 %v567, 1.442695
        %v620 = vpow.pop %v619
        %v621 = vmul.f32 %v568, 1.442695
        %v622 = vpow.pop %v621
        %v623 = vmul.f32 %v569, 1.442695
        %v624 = vpow.pop %v623
        %v625 = vmul.f32 %v570, 1.442695
        %v626 = vpow.pop %v625
        %v627 = vmul.f32 %v571, 1.442695
        %v628 = vpow.pop %v627
        %v629 = vmul.f32 %v572, 1.442695
        %v630 = vpow.pop %v629
        %v631 = vmul.f32 %v573, 1.442695
        %v632 = vpow.pop %v631
        %v633 = vmul.f32 %v574, 1.442695
        %v634 = vpow.pop %v633
        %v635 = vmul.f32 %v575, 1.442695
        %v636 = vpow.pop %v635
        %v637 = vmul.f32 %v576, 1.442695
        %v638 = vpow.pop %v637
        %v639 = vmul.f32 %v577, 1.442695
        %v640 = vpow.pop %v639
        %v641 = vmul.f32 %v578, 1.442695
        %v642 = vpow.pop %v641
        %v643 = vadd.f32 %v580, %v582
        %644 = vadd.xlane.f32.xlu0 %v643
        %v645 = vpop.xlane.xlu0 %644
        %v646 = vadd.f32 %v584, %v586
        %647 = vadd.xlane.f32.xlu0 %v646
        %v648 = vpop.xlane.xlu0 %647
        %v649 = vadd.f32 %v588, %v590
        %650 = vadd.xlane.f32.xlu0 %v649
        %v651 = vpop.xlane.xlu0 %650
        %v652 = vadd.f32 %v592, %v594
        %653 = vadd.xlane.f32.xlu0 %v652
        %v654 = vpop.xlane.xlu0 %653
        %v655 = vadd.f32 %v596, %v598
        %656 = vadd.xlane.f32.xlu0 %v655
        %v657 = vpop.xlane.xlu0 %656
        %v658 = vadd.f32 %v600, %v602
        %659 = vadd.xlane.f32.xlu0 %v658
        %v660 = vpop.xlane.xlu0 %659
        %v661 = vadd.f32 %v604, %v606
        %662 = vadd.xlane.f32.xlu0 %v661
        %v663 = vpop.xlane.xlu0 %662
        %v664 = vadd.f32 %v608, %v610
        %665 = vadd.xlane.f32.xlu0 %v664
        %v666 = vpop.xlane.xlu0 %665
        %v667 = vadd.f32 %v612, %v614
        %668 = vadd.xlane.f32.xlu0 %v667
        %v669 = vpop.xlane.xlu0 %668
        %v670 = vadd.f32 %v616, %v618
        %671 = vadd.xlane.f32.xlu0 %v670
        %v672 = vpop.xlane.xlu0 %671
        %v673 = vadd.f32 %v620, %v622
        %674 = vadd.xlane.f32.xlu0 %v673
        %v675 = vpop.xlane.xlu0 %674
        %v676 = vadd.f32 %v624, %v626
        %677 = vadd.xlane.f32.xlu0 %v676
        %v678 = vpop.xlane.xlu0 %677
        %v679 = vadd.f32 %v628, %v630
        %680 = vadd.xlane.f32.xlu0 %v679
        %v681 = vpop.xlane.xlu0 %680
        %v682 = vadd.f32 %v632, %v634
        %683 = vadd.xlane.f32.xlu0 %v682
        %v684 = vpop.xlane.xlu0 %683
        %v685 = vadd.f32 %v636, %v638
        %686 = vadd.xlane.f32.xlu0 %v685
        %v687 = vpop.xlane.xlu0 %686
        %v688 = vadd.f32 %v640, %v642
        %689 = vadd.xlane.f32.xlu0 %v688
        %v690 = vpop.xlane.xlu0 %689
        %v691 = vrcp.pop %v645
        %v692 = vmul.f32 1.0, %v691
        %v693 = vrcp.pop %v648
        %v694 = vmul.f32 1.0, %v693
        %v695 = vrcp.pop %v651
        %v696 = vmul.f32 1.0, %v695
        %v697 = vrcp.pop %v654
        %v698 = vmul.f32 1.0, %v697
        %v699 = vrcp.pop %v657
        %v700 = vmul.f32 1.0, %v699
        %v701 = vrcp.pop %v660
        %v702 = vmul.f32 1.0, %v701
        %v703 = vrcp.pop %v663
        %v704 = vmul.f32 1.0, %v703
        %v705 = vrcp.pop %v666
        %v706 = vmul.f32 1.0, %v705
        %v707 = vrcp.pop %v669
        %v708 = vmul.f32 1.0, %v707
        %v709 = vrcp.pop %v672
        %v710 = vmul.f32 1.0, %v709
        %v711 = vrcp.pop %v675
        %v712 = vmul.f32 1.0, %v711
        %v713 = vrcp.pop %v678
        %v714 = vmul.f32 1.0, %v713
        %v715 = vrcp.pop %v681
        %v716 = vmul.f32 1.0, %v715
        %v717 = vrcp.pop %v684
        %v718 = vmul.f32 1.0, %v717
        %v719 = vrcp.pop %v687
        %v720 = vmul.f32 1.0, %v719
        %v721 = vrcp.pop %v690
        %v722 = vmul.f32 1.0, %v721
        %v723 = vmul.f32 %v580, %v692
        %v724 = vmul.f32 %v582, %v692
        %v725 = vmul.f32 %v584, %v694
        %v726 = vmul.f32 %v586, %v694
        %v727 = vmul.f32 %v588, %v696
        %v728 = vmul.f32 %v590, %v696
        %v729 = vmul.f32 %v592, %v698
        %v730 = vmul.f32 %v594, %v698
        %v731 = vmul.f32 %v596, %v700
        %v732 = vmul.f32 %v598, %v700
        %v733 = vmul.f32 %v600, %v702
        %v734 = vmul.f32 %v602, %v702
        %v735 = vmul.f32 %v604, %v704
        %v736 = vmul.f32 %v606, %v704
        %v737 = vmul.f32 %v608, %v706
        %v738 = vmul.f32 %v610, %v706
        %v739 = vmul.f32 %v612, %v708
        %v740 = vmul.f32 %v614, %v708
        %v741 = vmul.f32 %v616, %v710
        %v742 = vmul.f32 %v618, %v710
        %v743 = vmul.f32 %v620, %v712
        %v744 = vmul.f32 %v622, %v712
        %v745 = vmul.f32 %v624, %v714
        %v746 = vmul.f32 %v626, %v714
        %v747 = vmul.f32 %v628, %v716
        %v748 = vmul.f32 %v630, %v716
        %v749 = vmul.f32 %v632, %v718
        %v750 = vmul.f32 %v634, %v718
        %v751 = vmul.f32 %v636, %v720
        %v752 = vmul.f32 %v638, %v720
        %v753 = vmul.f32 %v640, %v722
        %v754 = vmul.f32 %v642, %v722
        %v755 = vpack.c.bf16 %v725, %v723
        %v756 = vpack.c.bf16 %v726, %v724
        %v757 = vpack.c.bf16 %v729, %v727
        %v758 = vpack.c.bf16 %v730, %v728
        %v759 = vpack.c.bf16 %v733, %v731
        %v760 = vpack.c.bf16 %v734, %v732
        %v761 = vpack.c.bf16 %v737, %v735
        %v762 = vpack.c.bf16 %v738, %v736
        %v763 = vpack.c.bf16 %v741, %v739
        %v764 = vpack.c.bf16 %v742, %v740
        %v765 = vpack.c.bf16 %v745, %v743
        %v766 = vpack.c.bf16 %v746, %v744
        %v767 = vpack.c.bf16 %v749, %v747
        %v768 = vpack.c.bf16 %v750, %v748
        %v769 = vpack.c.bf16 %v753, %v751
        %v770 = vpack.c.bf16 %v754, %v752
        %771 = vxpose.xlu0.c.b16.start [1/8] %v313, 128
        %772 = vxpose.xlu0.c.b16.cont [2/8] 0, 128
        %773 = vxpose.xlu0.c.b16.cont [3/8] 0, 128
        %774 = vxpose.xlu0.c.b16.cont [4/8] 0, 128
        %775 = vxpose.xlu0.c.b16.cont [5/8] 0, 128
        %776 = vxpose.xlu0.c.b16.cont [6/8] 0, 128
        %777 = vxpose.xlu0.c.b16.cont [7/8] 0, 128
        %778 = vxpose.xlu0.c.b16.end [8/8] 0, 128
        %v779 = vpop.trf.xlu0
        %v780 = vpop.trf.xlu0
        %v781 = vpop.trf.xlu0
        %v782 = vpop.trf.xlu0
        %v783 = vpop.trf.xlu0
        %v784 = vpop.trf.xlu0
        %v785 = vpop.trf.xlu0
        %v786 = vpop.trf.xlu0
        %v788 = vsel %vm354, %v779, 0
        %v791 = vsel %vm354, %v780, 0
        %v794 = vsel %vm354, %v781, 0
        %v797 = vsel %vm354, %v782, 0
        %v800 = vsel %vm354, %v783, 0
        %v803 = vsel %vm354, %v784, 0
        %v806 = vsel %vm354, %v785, 0
        %v809 = vsel %vm354, %v786, 0
        %811 = vmatprep.subr.bf16.mxu0 0
        %812 = vmatpush1.bf16.msra.mxu0 0
        %813 = vmatprep.subr.bf16.mxu0 0
        %814 = vmatpush1.bf16.msra.mxu0 0
        %815 = vmatprep.subr.bf16.mxu0 0
        %816 = vmatpush1.bf16.msra.mxu0 0
        %817 = vmatprep.subr.bf16.mxu0 0
        %818 = vmatpush1.bf16.msra.mxu0 0
        %819 = vmatprep.subr.bf16.mxu0 0
        %820 = vmatpush1.bf16.msra.mxu0 0
        %821 = vmatprep.subr.bf16.mxu0 0
        %822 = vmatpush1.bf16.msra.mxu0 0
        %823 = vmatprep.subr.bf16.mxu0 0
        %824 = vmatpush1.bf16.msra.mxu0 0
        %825 = vmatprep.subr.bf16.mxu0 %v384
        %826 = vmatpush1.bf16.msra.mxu0 %v381
        %827 = vmatprep.subr.bf16.mxu0 0
        %828 = vmatpush2.bf16.msra.mxu0 0
        %829 = vmatprep.subr.bf16.mxu0 0
        %830 = vmatpush2.bf16.msra.mxu0 0
        %831 = vmatprep.subr.bf16.mxu0 0
        %832 = vmatpush2.bf16.msra.mxu0 0
        %833 = vmatprep.subr.bf16.mxu0 0
        %834 = vmatpush2.bf16.msra.mxu0 0
        %835 = vmatprep.subr.bf16.mxu0 0
        %836 = vmatpush2.bf16.msra.mxu0 0
        %837 = vmatprep.subr.bf16.mxu0 0
        %838 = vmatpush2.bf16.msra.mxu0 0
        %839 = vmatprep.subr.bf16.mxu0 0
        %840 = vmatpush2.bf16.msra.mxu0 0
        %841 = vmatprep.subr.bf16.mxu0 0
        %842 = vmatpush2.bf16.msra.mxu0 0
        %843 = vmatprep.mubr.bf16.mxu0 0
        %844 = vmatmul.mubr.bf16.gmra.mxu0 %v788
        %v845 = vpop.f32.mrf.mxu0
        %v846 = vadd.f32 0.0, %v845
        %v847 = vpop.f32.mrf.mxu0
        %v848 = vadd.f32 0.0, %v847
        %v849 = vpop.f32.mrf.mxu0
        %v850 = vadd.f32 0.0, %v849
        %v851 = vpop.f32.mrf.mxu0
        %v852 = vadd.f32 0.0, %v851
        %853 = vmatprep.mubr.bf16.mxu0 0
        %854 = vmatmul.mubr.bf16.gmra.mxu0 %v791
        %v855 = vpop.f32.mrf.mxu0
        %v856 = vadd.f32 0.0, %v855
        %v857 = vpop.f32.mrf.mxu0
        %v858 = vadd.f32 0.0, %v857
        %v859 = vpop.f32.mrf.mxu0
        %v860 = vadd.f32 0.0, %v859
        %v861 = vpop.f32.mrf.mxu0
        %v862 = vadd.f32 0.0, %v861
        %863 = vmatprep.mubr.bf16.mxu0 0
        %864 = vmatmul.mubr.bf16.gmra.mxu0 %v794
        %v865 = vpop.f32.mrf.mxu0
        %v866 = vadd.f32 0.0, %v865
        %v867 = vpop.f32.mrf.mxu0
        %v868 = vadd.f32 0.0, %v867
        %v869 = vpop.f32.mrf.mxu0
        %v870 = vadd.f32 0.0, %v869
        %v871 = vpop.f32.mrf.mxu0
        %v872 = vadd.f32 0.0, %v871
        %873 = vmatprep.mubr.bf16.mxu0 0
        %874 = vmatmul.mubr.bf16.gmra.mxu0 %v797
        %v875 = vpop.f32.mrf.mxu0
        %v876 = vadd.f32 0.0, %v875
        %v877 = vpop.f32.mrf.mxu0
        %v878 = vadd.f32 0.0, %v877
        %v879 = vpop.f32.mrf.mxu0
        %v880 = vadd.f32 0.0, %v879
        %v881 = vpop.f32.mrf.mxu0
        %v882 = vadd.f32 0.0, %v881
        %883 = vmatprep.mubr.bf16.mxu0 0
        %884 = vmatmul.mubr.bf16.gmra.mxu0 %v800
        %v885 = vpop.f32.mrf.mxu0
        %v886 = vadd.f32 0.0, %v885
        %v887 = vpop.f32.mrf.mxu0
        %v888 = vadd.f32 0.0, %v887
        %v889 = vpop.f32.mrf.mxu0
        %v890 = vadd.f32 0.0, %v889
        %v891 = vpop.f32.mrf.mxu0
        %v892 = vadd.f32 0.0, %v891
        %893 = vmatprep.mubr.bf16.mxu0 0
        %894 = vmatmul.mubr.bf16.gmra.mxu0 %v803
        %v895 = vpop.f32.mrf.mxu0
        %v896 = vadd.f32 0.0, %v895
        %v897 = vpop.f32.mrf.mxu0
        %v898 = vadd.f32 0.0, %v897
        %v899 = vpop.f32.mrf.mxu0
        %v900 = vadd.f32 0.0, %v899
        %v901 = vpop.f32.mrf.mxu0
        %v902 = vadd.f32 0.0, %v901
        %903 = vmatprep.mubr.bf16.mxu0 0
        %904 = vmatmul.mubr.bf16.gmra.mxu0 %v806
        %v905 = vpop.f32.mrf.mxu0
        %v906 = vadd.f32 0.0, %v905
        %v907 = vpop.f32.mrf.mxu0
        %v908 = vadd.f32 0.0, %v907
        %v909 = vpop.f32.mrf.mxu0
        %v910 = vadd.f32 0.0, %v909
        %v911 = vpop.f32.mrf.mxu0
        %v912 = vadd.f32 0.0, %v911
        %913 = vmatprep.mubr.bf16.mxu0 0
        %914 = vmatmul.mubr.bf16.gmra.mxu0 %v809
        %v915 = vpop.f32.mrf.mxu0
        %v916 = vadd.f32 0.0, %v915
        %v917 = vpop.f32.mrf.mxu0
        %v918 = vadd.f32 0.0, %v917
        %v919 = vpop.f32.mrf.mxu0
        %v920 = vadd.f32 0.0, %v919
        %v921 = vpop.f32.mrf.mxu0
        %v922 = vadd.f32 0.0, %v921
        %923 = vdwg.mxu0
        %v924 = vpack.c.bf16 %v850, %v846
        %v925 = vpack.c.bf16 %v852, %v848
        %v926 = vpack.c.bf16 %v860, %v856
        %v927 = vpack.c.bf16 %v862, %v858
        %v928 = vpack.c.bf16 %v870, %v866
        %v929 = vpack.c.bf16 %v872, %v868
        %v930 = vpack.c.bf16 %v880, %v876
        %v931 = vpack.c.bf16 %v882, %v878
        %v932 = vpack.c.bf16 %v890, %v886
        %v933 = vpack.c.bf16 %v892, %v888
        %v934 = vpack.c.bf16 %v900, %v896
        %v935 = vpack.c.bf16 %v902, %v898
        %v936 = vpack.c.bf16 %v910, %v906
        %v937 = vpack.c.bf16 %v912, %v908
        %v938 = vpack.c.bf16 %v920, %v916
        %v939 = vpack.c.bf16 %v922, %v918
        %940 = vmatprep.subr.bf16.mxu0 %v939
        %941 = vmatpush1.bf16.xpose.msra.mxu0 %v938
        %942 = vmatprep.subr.bf16.mxu0 %v937
        %943 = vmatpush1.bf16.xpose.msra.mxu0 %v936
        %944 = vmatprep.subr.bf16.mxu0 %v935
        %945 = vmatpush1.bf16.xpose.msra.mxu0 %v934
        %946 = vmatprep.subr.bf16.mxu0 %v933
        %947 = vmatpush1.bf16.xpose.msra.mxu0 %v932
        %948 = vmatprep.subr.bf16.mxu0 %v931
        %949 = vmatpush1.bf16.xpose.msra.mxu0 %v930
        %950 = vmatprep.subr.bf16.mxu0 %v929
        %951 = vmatpush1.bf16.xpose.msra.mxu0 %v928
        %952 = vmatprep.subr.bf16.mxu0 %v927
        %953 = vmatpush1.bf16.xpose.msra.mxu0 %v926
        %954 = vmatprep.subr.bf16.mxu0 %v925
        %955 = vmatpush1.bf16.xpose.msra.mxu0 %v924
        %956 = vmatprep.subr.bf16.mxu0 0
        %957 = vmatpush2.bf16.xpose.msra.mxu0 0
        %958 = vmatprep.subr.bf16.mxu0 0
        %959 = vmatpush2.bf16.xpose.msra.mxu0 0
        %960 = vmatprep.subr.bf16.mxu0 0
        %961 = vmatpush2.bf16.xpose.msra.mxu0 0
        %962 = vmatprep.subr.bf16.mxu0 0
        %963 = vmatpush2.bf16.xpose.msra.mxu0 0
        %964 = vmatprep.subr.bf16.mxu0 0
        %965 = vmatpush2.bf16.xpose.msra.mxu0 0
        %966 = vmatprep.subr.bf16.mxu0 0
        %967 = vmatpush2.bf16.xpose.msra.mxu0 0
        %968 = vmatprep.subr.bf16.mxu0 0
        %969 = vmatpush2.bf16.xpose.msra.mxu0 0
        %970 = vmatprep.subr.bf16.mxu0 0
        %971 = vmatpush2.bf16.xpose.msra.mxu0 0
        %972 = vmatprep.mubr.bf16.mxu0 %v756
        %973 = vmatmul.mubr.bf16.gmra.mxu0 %v755
        %v974 = vpop.f32.mrf.mxu0
        %v975 = vadd.f32 0.0, %v974
        %v976 = vpop.f32.mrf.mxu0
        %v977 = vpop.f32.mrf.mxu0
        %v978 = vadd.f32 0.0, %v977
        %v979 = vpop.f32.mrf.mxu0
        %980 = vmatprep.mubr.bf16.mxu0 %v758
        %981 = vmatmul.mubr.bf16.gmra.mxu0 %v757
        %v982 = vpop.f32.mrf.mxu0
        %v983 = vadd.f32 0.0, %v982
        %v984 = vpop.f32.mrf.mxu0
        %v985 = vpop.f32.mrf.mxu0
        %v986 = vadd.f32 0.0, %v985
        %v987 = vpop.f32.mrf.mxu0
        %988 = vmatprep.mubr.bf16.mxu0 %v760
        %989 = vmatmul.mubr.bf16.gmra.mxu0 %v759
        %v990 = vpop.f32.mrf.mxu0
        %v991 = vadd.f32 0.0, %v990
        %v992 = vpop.f32.mrf.mxu0
        %v993 = vpop.f32.mrf.mxu0
        %v994 = vadd.f32 0.0, %v993
        %v995 = vpop.f32.mrf.mxu0
        %996 = vmatprep.mubr.bf16.mxu0 %v762
        %997 = vmatmul.mubr.bf16.gmra.mxu0 %v761
        %v998 = vpop.f32.mrf.mxu0
        %v999 = vadd.f32 0.0, %v998
        %v1000 = vpop.f32.mrf.mxu0
        %v1001 = vpop.f32.mrf.mxu0
        %v1002 = vadd.f32 0.0, %v1001
        %v1003 = vpop.f32.mrf.mxu0
        %1004 = vmatprep.mubr.bf16.mxu0 %v764
        %1005 = vmatmul.mubr.bf16.gmra.mxu0 %v763
        %v1006 = vpop.f32.mrf.mxu0
        %v1007 = vadd.f32 0.0, %v1006
        %v1008 = vpop.f32.mrf.mxu0
        %v1009 = vpop.f32.mrf.mxu0
        %v1010 = vadd.f32 0.0, %v1009
        %v1011 = vpop.f32.mrf.mxu0
        %1012 = vmatprep.mubr.bf16.mxu0 %v766
        %1013 = vmatmul.mubr.bf16.gmra.mxu0 %v765
        %v1014 = vpop.f32.mrf.mxu0
        %v1015 = vadd.f32 0.0, %v1014
        %v1016 = vpop.f32.mrf.mxu0
        %v1017 = vpop.f32.mrf.mxu0
        %v1018 = vadd.f32 0.0, %v1017
        %v1019 = vpop.f32.mrf.mxu0
        %1020 = vmatprep.mubr.bf16.mxu0 %v768
        %1021 = vmatmul.mubr.bf16.gmra.mxu0 %v767
        %v1022 = vpop.f32.mrf.mxu0
        %v1023 = vadd.f32 0.0, %v1022
        %v1024 = vpop.f32.mrf.mxu0
        %v1025 = vpop.f32.mrf.mxu0
        %v1026 = vadd.f32 0.0, %v1025
        %v1027 = vpop.f32.mrf.mxu0
        %1028 = vmatprep.mubr.bf16.mxu0 %v770
        %1029 = vmatmul.mubr.bf16.gmra.mxu0 %v769
        %v1030 = vpop.f32.mrf.mxu0
        %v1031 = vadd.f32 0.0, %v1030
        %v1032 = vpop.f32.mrf.mxu0
        %v1033 = vpop.f32.mrf.mxu0
        %v1034 = vadd.f32 0.0, %v1033
        %v1035 = vpop.f32.mrf.mxu0
        %1036 = vdwg.mxu0
        %v1037 = vpack.c.bf16 %v978, %v975
        %v1038 = vpack.c.bf16 %v986, %v983
        %v1039 = vpack.c.bf16 %v994, %v991
        %v1040 = vpack.c.bf16 %v1002, %v999
        %v1041 = vpack.c.bf16 %v1010, %v1007
        %v1042 = vpack.c.bf16 %v1018, %v1015
        %v1043 = vpack.c.bf16 %v1026, %v1023
        %v1044 = vpack.c.bf16 %v1034, %v1031
        %v1061 = vunpack.c.l.b16 %v316
        %v1062 = vunpack.c.l.b16 %v317
        %v1063 = vunpack.c.l.b16 %v318
        %v1064 = vunpack.c.l.b16 %v319
        %v1065 = vunpack.c.l.b16 %v320
        %v1066 = vunpack.c.l.b16 %v321
        %v1067 = vunpack.c.l.b16 %v322
        %v1068 = vunpack.c.l.b16 %v323
        %v1069 = vunpack.c.l.b16 %v324
        %v1070 = vunpack.c.l.b16 %v325
        %v1071 = vunpack.c.l.b16 %v326
        %v1072 = vunpack.c.l.b16 %v327
        %v1073 = vunpack.c.l.b16 %v328
        %v1074 = vunpack.c.l.b16 %v329
        %v1075 = vunpack.c.l.b16 %v330
        %v1076 = vunpack.c.l.b16 %v331
        %v1077 = vpack.c.b16 %v1062, %v1061
        %v1078 = vpack.c.b16 %v1064, %v1063
        %v1079 = vpack.c.b16 %v1066, %v1065
        %v1080 = vpack.c.b16 %v1068, %v1067
        %v1081 = vpack.c.b16 %v1070, %v1069
        %v1082 = vpack.c.b16 %v1072, %v1071
        %v1083 = vpack.c.b16 %v1074, %v1073
        %v1084 = vpack.c.b16 %v1076, %v1075
        %v1093 = vmul.bf16 %v1037, %v1077
        %v1094 = vmul.bf16 %v1038, %v1078
        %v1095 = vmul.bf16 %v1039, %v1079
        %v1096 = vmul.bf16 %v1040, %v1080
        %v1097 = vmul.bf16 %v1041, %v1081
        %v1098 = vmul.bf16 %v1042, %v1082
        %v1099 = vmul.bf16 %v1043, %v1083
        %v1100 = vmul.bf16 %v1044, %v1084
        %1101 = vmatprep.subr.bf16.mxu0 0
        %1102 = vmatpush1.bf16.xpose.msra.mxu0 %v1100
        %1103 = vmatprep.subr.bf16.mxu0 0
        %1104 = vmatpush1.bf16.xpose.msra.mxu0 %v1099
        %1105 = vmatprep.subr.bf16.mxu0 0
        %1106 = vmatpush1.bf16.xpose.msra.mxu0 %v1098
        %1107 = vmatprep.subr.bf16.mxu0 0
        %1108 = vmatpush1.bf16.xpose.msra.mxu0 %v1097
        %1109 = vmatprep.subr.bf16.mxu0 0
        %1110 = vmatpush1.bf16.xpose.msra.mxu0 %v1096
        %1111 = vmatprep.subr.bf16.mxu0 0
        %1112 = vmatpush1.bf16.xpose.msra.mxu0 %v1095
        %1113 = vmatprep.subr.bf16.mxu0 0
        %1114 = vmatpush1.bf16.xpose.msra.mxu0 %v1094
        %1115 = vmatprep.subr.bf16.mxu0 0
        %1116 = vmatpush1.bf16.xpose.msra.mxu0 %v1093
        %1117 = vmatprep.subr.bf16.mxu0 0
        %1118 = vmatpush2.bf16.xpose.msra.mxu0 0
        %1119 = vmatprep.subr.bf16.mxu0 0
        %1120 = vmatpush2.bf16.xpose.msra.mxu0 0
        %1121 = vmatprep.subr.bf16.mxu0 0
        %1122 = vmatpush2.bf16.xpose.msra.mxu0 0
        %1123 = vmatprep.subr.bf16.mxu0 0
        %1124 = vmatpush2.bf16.xpose.msra.mxu0 0
        %1125 = vmatprep.subr.bf16.mxu0 0
        %1126 = vmatpush2.bf16.xpose.msra.mxu0 0
        %1127 = vmatprep.subr.bf16.mxu0 0
        %1128 = vmatpush2.bf16.xpose.msra.mxu0 0
        %1129 = vmatprep.subr.bf16.mxu0 0
        %1130 = vmatpush2.bf16.xpose.msra.mxu0 0
        %1131 = vmatprep.subr.bf16.mxu0 0
        %1132 = vmatpush2.bf16.xpose.msra.mxu0 0
        %1133 = vmatprep.mubr.bf16.mxu0 0
        %1134 = vmatmul.mubr.bf16.gmra.mxu0 %v314
        %v1135 = vpop.f32.mrf.mxu0
        %v1136 = vadd.f32 0.0, %v1135
        %v1137 = vpop.f32.mrf.mxu0
        %v1138 = vpop.f32.mrf.mxu0
        %v1139 = vpop.f32.mrf.mxu0
        %1140 = vdwg.mxu0
        %v1141 = vpack.c.bf16 %v1136, %v1136
        %1142 = vmatprep.subr.bf16.mxu0 0
        %1143 = vmatpush1.bf16.xpose.msra.mxu0 0
        %1144 = vmatprep.subr.bf16.mxu0 0
        %1145 = vmatpush1.bf16.xpose.msra.mxu0 0
        %1146 = vmatprep.subr.bf16.mxu0 0
        %1147 = vmatpush1.bf16.xpose.msra.mxu0 0
        %1148 = vmatprep.subr.bf16.mxu0 0
        %1149 = vmatpush1.bf16.xpose.msra.mxu0 0
        %1150 = vmatprep.subr.bf16.mxu0 0
        %1151 = vmatpush1.bf16.xpose.msra.mxu0 0
        %1152 = vmatprep.subr.bf16.mxu0 0
        %1153 = vmatpush1.bf16.xpose.msra.mxu0 0
        %1154 = vmatprep.subr.bf16.mxu0 0
        %1155 = vmatpush1.bf16.xpose.msra.mxu0 0
        %1156 = vmatprep.subr.bf16.mxu0 0
        %1157 = vmatpush1.bf16.xpose.msra.mxu0 %v311
        %1158 = vmatprep.subr.bf16.mxu0 0
        %1159 = vmatpush2.bf16.xpose.msra.mxu0 0
        %1160 = vmatprep.subr.bf16.mxu0 0
        %1161 = vmatpush2.bf16.xpose.msra.mxu0 0
        %1162 = vmatprep.subr.bf16.mxu0 0
        %1163 = vmatpush2.bf16.xpose.msra.mxu0 0
        %1164 = vmatprep.subr.bf16.mxu0 0
        %1165 = vmatpush2.bf16.xpose.msra.mxu0 0
        %1166 = vmatprep.subr.bf16.mxu0 0
        %1167 = vmatpush2.bf16.xpose.msra.mxu0 0
        %1168 = vmatprep.subr.bf16.mxu0 0
        %1169 = vmatpush2.bf16.xpose.msra.mxu0 0
        %1170 = vmatprep.subr.bf16.mxu0 0
        %1171 = vmatpush2.bf16.xpose.msra.mxu0 0
        %1172 = vmatprep.subr.bf16.mxu0 0
        %1173 = vmatpush2.bf16.xpose.msra.mxu0 0
        %1174 = vmatprep.mubr.bf16.mxu0 0
        %1175 = vmatmul.mubr.bf16.gmra.mxu0 %v1141
        %v1176 = vpop.f32.mrf.mxu0
        %v1177 = vadd.f32 0.0, %v1176
        %v1178 = vpop.f32.mrf.mxu0
        %v1179 = vpop.f32.mrf.mxu0
        %v1180 = vpop.f32.mrf.mxu0
        %1181 = vdwg.mxu0
        %v1182 = vpack.c.bf16 %v1177, %v1177
        %1184 = vset.pattern.permute.xlu0 0
        %1185 = vperm.xlu0 %1184, %v315
        %v1186 = vpop.permute.xlu0 %1185
        %v1189 = vsel %vm354, %v1182, 0
        %1191 = vmatprep.subr.bf16.mxu0 0
        %1192 = vmatpush1.bf16.msra.mxu0 0
        %1193 = vmatprep.subr.bf16.mxu0 0
        %1194 = vmatpush1.bf16.msra.mxu0 0
        %1195 = vmatprep.subr.bf16.mxu0 0
        %1196 = vmatpush1.bf16.msra.mxu0 0
        %1197 = vmatprep.subr.bf16.mxu0 0
        %1198 = vmatpush1.bf16.msra.mxu0 0
        %1199 = vmatprep.subr.bf16.mxu0 0
        %1200 = vmatpush1.bf16.msra.mxu0 0
        %1201 = vmatprep.subr.bf16.mxu0 0
        %1202 = vmatpush1.bf16.msra.mxu0 0
        %1203 = vmatprep.subr.bf16.mxu0 0
        %1204 = vmatpush1.bf16.msra.mxu0 0
        %1205 = vmatprep.subr.bf16.mxu0 %v384
        %1206 = vmatpush1.bf16.msra.mxu0 %v381
        %1207 = vmatprep.subr.bf16.mxu0 0
        %1208 = vmatpush2.bf16.msra.mxu0 0
        %1209 = vmatprep.subr.bf16.mxu0 0
        %1210 = vmatpush2.bf16.msra.mxu0 0
        %1211 = vmatprep.subr.bf16.mxu0 0
        %1212 = vmatpush2.bf16.msra.mxu0 0
        %1213 = vmatprep.subr.bf16.mxu0 0
        %1214 = vmatpush2.bf16.msra.mxu0 0
        %1215 = vmatprep.subr.bf16.mxu0 0
        %1216 = vmatpush2.bf16.msra.mxu0 0
        %1217 = vmatprep.subr.bf16.mxu0 0
        %1218 = vmatpush2.bf16.msra.mxu0 0
        %1219 = vmatprep.subr.bf16.mxu0 0
        %1220 = vmatpush2.bf16.msra.mxu0 0
        %1221 = vmatprep.subr.bf16.mxu0 0
        %1222 = vmatpush2.bf16.msra.mxu0 0
        %1223 = vmatprep.mubr.bf16.mxu0 0
        %1224 = vmatmul.mubr.bf16.gmra.mxu0 %v1189
        %v1225 = vpop.f32.mrf.mxu0
        %v1226 = vadd.f32 %v1186, %v1225
        %v1227 = vpop.f32.mrf.mxu0
        %v1228 = vadd.f32 %v1186, %v1227
        %v1229 = vpop.f32.mrf.mxu0
        %v1230 = vpop.f32.mrf.mxu0
        %1231 = vdwg.mxu0
        %v1234 = vcombine.low %v1226, %v1228
        %1236 = vst [vmem:[%s309] sm:$0xff] %v1234
        %s1237 = sand.u32 %s185, 1
        %s1238 = scalar_lea.sflag [#allocation4], %s1237
        %s1239 = sand.u32 %s185, 1
        %s1240 = smul.addr %s1239, 8
        %s1241 = scalar_lea.vmem [#allocation7], %s1240
        // Predicated region
        $region57: #{tpu_custom_call.1} parent=47 // pred_check
          %p1242 = pneg %p195
        $region58: #{tpu_custom_call.1} parent=47 // pred_check_branch
          %1244 = sbr.rel (%p1242) target = $region60
        $region59: #{tpu_custom_call.1} parent=47 // pred_region
          %s1246 = ssub.s32 128, 128
          %1247 = vsyncadd %s1238, %s1246
          %s1248 = smul.addr %s25, 2
          %s1249 = smul.addr %s1248, 64
          %s1250 = scalar_lea.hbm %s7, %s1249
          %s1252 = sshll.u32 %s1241, 4
          %s1253 = int_to_ptr.vmem [resolvable:$true] %s1252
          %1255 = dma.vmem_to_hbm [thread:$0]  %s1253, 128, %s1250, %s1238
        $region60: #{tpu_custom_call.1} parent=47 // pred_fallthru
          _
      $region48: #{tpu_custom_call.1} parent=5 // pred_fallthru
        _
      %p1256 = scmp.le.s32.totalorder 2, %s20
      // Predicated region
      $region61: #{tpu_custom_call.1} parent=5 // pred_check
        %p1257 = pneg %p1256
      $region62: #{tpu_custom_call.1} parent=5 // pred_check_branch
        %1259 = sbr.rel (%p1257) target = $region64
      $region63: #{tpu_custom_call.1} parent=5 // pred_region
        %s1260 = ssub.s32 %s20, 2
        // Predicated region
        $region65: #{tpu_custom_call.1} parent=63 // pred_check
          %p1261 = pneg %p201
        $region66: #{tpu_custom_call.1} parent=63 // pred_check_branch
          %1263 = sbr.rel (%p1261) target = $region68
        $region67: #{tpu_custom_call.1} parent=63 // pred_region
          %s1264 = sand.u32 %s186, 1
          %s1265 = scalar_lea.sflag [#allocation4], %s1264
          %s1266 = sand.u32 %s186, 1
          %s1267 = smul.addr %s1266, 8
          %s1268 = scalar_lea.vmem [#allocation7], %s1267
          %1269 = dma.done %s1265, 128
        $region68: #{tpu_custom_call.1} parent=63 // pred_fallthru
          _
      $region64: #{tpu_custom_call.1} parent=5 // pred_fallthru
        _
    $region6: #{tpu_custom_call.1} parent=1 // loop_footer
      %s24 = sadd.s32 1, %s20
    $region7: #{tpu_custom_call.1} parent=1 // loop_footer_branch
      %19 = sbr.rel target = $region3
    $region8: #{tpu_custom_call.1} parent=1 // loop_exit
      _
    %1270 = vsyncpa [#allocation3], 1
    %s1271 = scalar_lea.sflag [#allocation3], 1
    %1272 = vsyncpa %s1271, 1
    %1273 = vsyncpa [#allocation6], 1
    %1274 = vsyncpa [#allocation4], 1
    %s1275 = scalar_lea.sflag [#allocation4], 1
    %1276 = vsyncpa %s1275, 1

</llo_original>
